<compile_context>
chip_gen: v7x
topology: tpu7x:2x2x1
jax: 0.10.0
libtpu: 0.0.40
codegen_flags: <defaults>
</compile_context>

<pallas_src>
import functools
import math

import jax
import jax.numpy as jnp
from jax.experimental import pallas as pl
from jax.experimental.pallas import tpu as pltpu

_LANE = 128
_SUBLANE_TILE = 1024  # 8 sublanes * 128 lanes


def _round_up(x: int, m: int) -> int:
    return ((x + m - 1) // m) * m


def _layer_plan(num_channels, out_channels, num_layers, decrease_percent):
    """(c_in, c_out) per layer, matching the PyTorch module's channel schedule."""
    plan = []
    c_in = num_channels
    for _ in range(num_layers - 1):
        c_mid = max(int(c_in * (1.0 - decrease_percent)), 1)
        plan.append((c_in, c_mid))
        c_in = c_mid
    plan.append((c_in, out_channels))
    return tuple(plan)


def init_middle_fully_connected_params(
    key, num_channels, out_channels, num_layers=3, decrease_percent=0.25,
    dtype=jnp.bfloat16,
):
    """List of (W, b): W (C_out, C_in), b (C_out,), PyTorch-Conv2d-style init."""
    plan = _layer_plan(num_channels, out_channels, num_layers, decrease_percent)
    params = []
    for ci, co in plan:
        key, kw, kb = jax.random.split(key, 3)
        bound = 1.0 / math.sqrt(ci)
        w = jax.random.uniform(kw, (co, ci), jnp.float32, -bound, bound).astype(dtype)
        b = jax.random.uniform(kb, (co,), jnp.float32, -bound, bound).astype(dtype)
        params.append((w, b))
    return params


def _fused_fc_kernel(w_ref, b_ref, x_ref, o_ref, *, layer_dims, neg_slope):
    """Fused stack of 1x1 convs on pixel-dense slabs.

    w_ref : SMEM f32 flat, concatenated row-major (C_out, C_in) weights per layer.
    b_ref : SMEM f32 flat, concatenated (C_out,) biases per layer.
    x_ref : VMEM (Nb, C0, SB, 128) bf16 — each x_ref[n, ci] is a dense
            (sublane x lane) pixel slab.
    o_ref : VMEM (Nb, C_last, SB, 128) bf16.
    """
    nb = x_ref.shape[0]
    num_layers = len(layer_dims)
    for n in range(nb):
        # Live activations: list of (SB, 128) f32 slabs, one per channel.
        acts = [x_ref[n, ci].astype(jnp.float32) for ci in range(layer_dims[0][0])]
        w_off = 0
        b_off = 0
        for li, (c_in, c_out) in enumerate(layer_dims):
            new_acts = []
            for co in range(c_out):
                # Unrolled scalar-broadcast FMA chain on the VPU (no MXU).
                acc = acts[0] * w_ref[w_off + co * c_in]
                for ci in range(1, c_in):
                    acc = acc + acts[ci] * w_ref[w_off + co * c_in + ci]
                acc = acc + b_ref[b_off + co]           # bias in f32
                if li < num_layers - 1:
                    # F.leaky_relu default negative_slope = 0.01 (in f32),
                    # then one bf16 recast per layer to match PyTorch dtypes.
                    acc = jnp.where(acc >= 0.0, acc, neg_slope * acc)
                    acc = acc.astype(x_ref.dtype).astype(jnp.float32)
                new_acts.append(acc)
            acts = new_acts
            w_off += c_in * c_out
            b_off += c_out
        for co in range(len(acts)):
            o_ref[n, co] = acts[co].astype(o_ref.dtype)  # full-width lane-dense vst


def middle_fully_connected_forward(x_nchw, params, *, max_pixel_tile=64 * 1024):
    """Forward pass equivalent to MiddleFullyConnected.forward.

    x_nchw: (N, C, H, W) bf16. Returns (N, out_channels, H, W) bf16.
    """
    N, C, H, W = x_nchw.shape
    layer_dims = tuple((w.shape[1], w.shape[0]) for w, _ in params)
    assert layer_dims[0][0] == C, (layer_dims, C)
    c_out = layer_dims[-1][1]
    dt = x_nchw.dtype
    dt_bytes = jnp.dtype(dt).itemsize
    P = H * W

    # --- pack weights / biases into flat f32 arrays (whole-array SMEM residents)
    w_flat = jnp.concatenate([w.astype(jnp.float32).reshape(-1) for w, _ in params])
    b_flat = jnp.concatenate([b.astype(jnp.float32).reshape(-1) for _, b in params])

    # --- per-pixel VMEM footprint: double-buffered bf16 in/out blocks plus the
    #     live f32 activation slabs the body materializes.
    live_f32 = max(ci + co for ci, co in layer_dims)
    per_pix = (2 * C + 2 * c_out) * dt_bytes + (C + live_f32) * 4

    # --- generation-aware VMEM budget (v7x has 64 MiB physical vs 128 on v5e/v6e)
    try:
        phys_vmem = int(pltpu.get_tpu_info().vmem_capacity_bytes)
    except Exception:
        phys_vmem = 64 << 20  # conservative fallback = v7x
    tile_budget = int(0.35 * phys_vmem)

    # --- pixel tile: a multiple of 1024 (full 8x128 vreg tiles) or the whole
    #     (padded-to-128) pixel axis.
    P128 = _round_up(P, _LANE)
    tp_cap = min(max_pixel_tile,
                 max(_LANE, (tile_budget // per_pix) // _LANE * _LANE))
    if tp_cap >= P128:
        tp = P128
        # keep >=2 grid steps so both v7x TensorCores get work
        if N == 1 and P128 >= 2 * _SUBLANE_TILE:
            tp = max(_SUBLANE_TILE, _round_up(P128 // 2, _SUBLANE_TILE))
    else:
        tp = max(_SUBLANE_TILE, (tp_cap // _SUBLANE_TILE) * _SUBLANE_TILE)
    P_pad = _round_up(P128, tp)
    sb = tp // _LANE
    num_p_tiles = P_pad // tp

    # --- small-image / many-batch regime: block several images per grid step,
    #     keeping >=2 grid steps and staying inside the VMEM budget.
    nb = 1
    if num_p_tiles == 1 and N > 2:
        for d in sorted(d for d in range(1, N + 1) if N % d == 0):
            if N // d >= 2 and d * tp * per_pix <= tile_budget:
                nb = d
    n_tiles = N // nb

    # --- pixels on the lane axis: pure reshapes, no NCHW<->NHWC transposes.
    x3d = x_nchw.reshape(N, C, P)
    if P_pad != P:
        x3d = jnp.pad(x3d, ((0, 0), (0, 0), (0, P_pad - P)))
    x4d = x3d.reshape(N, C, P_pad // _LANE, _LANE)

    est_vmem = nb * tp * per_pix
    vmem_limit = int(min(phys_vmem // 2, max(32 << 20, 2 * est_vmem)))

    flops = 2 * N * P_pad * sum(ci * co for ci, co in layer_dims)
    bytes_accessed = (N * (C + c_out) * P_pad * dt_bytes
                      + (w_flat.size + b_flat.size) * 4)

    kernel = functools.partial(
        _fused_fc_kernel, layer_dims=layer_dims, neg_slope=0.01
    )

    smem_spec = pl.BlockSpec(memory_space=pltpu.MemorySpace.SMEM)
    out4d = pl.pallas_call(
        kernel,
        out_shape=jax.ShapeDtypeStruct((N, c_out, P_pad // _LANE, _LANE), dt),
        grid_spec=pltpu.PrefetchScalarGridSpec(
            num_scalar_prefetch=0,
            grid=(n_tiles, num_p_tiles),
            in_specs=[
                smem_spec,   # packed weights (SMEM, whole array, resident)
                smem_spec,   # packed biases  (SMEM, whole array, resident)
                pl.BlockSpec((nb, C, sb, _LANE), lambda n, p: (n, 0, p, 0)),
            ],
            out_specs=pl.BlockSpec((nb, c_out, sb, _LANE),
                                   lambda n, p: (n, 0, p, 0)),
        ),
        compiler_params=pltpu.CompilerParams(
            dimension_semantics=("parallel", "parallel"),
            vmem_limit_bytes=vmem_limit,
        ),
        cost_estimate=pl.CostEstimate(
            flops=flops, transcendentals=0, bytes_accessed=bytes_accessed
        ),
    )(w_flat, b_flat, x4d)

    out3d = out4d.reshape(N, c_out, P_pad)
    if P_pad != P:
        out3d = out3d[:, :, :P]
    return out3d.reshape(N, c_out, H, W)


def _reference_forward(x_nchw, params):
    """Pure-JAX reference (same math: f32 accumulate, bf16 recast per layer)."""
    N, C, H, W = x_nchw.shape
    x = x_nchw.reshape(N, C, H * W)
    num_layers = len(params)
    for ind, (w, b) in enumerate(params):
        y = jnp.einsum("oc,ncp->nop", w.astype(jnp.float32), x.astype(jnp.float32))
        y = y + b.astype(jnp.float32)[None, :, None]
        if ind < num_layers - 1:
            y = jnp.where(y >= 0.0, y, 0.01 * y)
        x = y.astype(x_nchw.dtype)
    return x.reshape(N, params[-1][0].shape[0], H, W)


if __name__ == "__main__":
    key = jax.random.PRNGKey(0)
    k_x, k_p = jax.random.split(key)

    # Small shapes: batch=2, channels=4, spatial=16x16, out_channels=8.
    N, C, H, W = 2, 4, 16, 16
    out_channels = 8
    x = jax.random.normal(k_x, (N, C, H, W), jnp.float32).astype(jnp.bfloat16)

    params = init_middle_fully_connected_params(
        k_p, num_channels=C, out_channels=out_channels, num_layers=3,
        decrease_percent=0.25, dtype=jnp.bfloat16,
    )

    out = jax.block_until_ready(middle_fully_connected_forward(x, params))
    ref = jax.block_until_ready(_reference_forward(x, params))

    assert out.shape == (N, out_channels, H, W), out.shape
    assert out.dtype == jnp.bfloat16, out.dtype
    err = float(jnp.max(jnp.abs(out.astype(jnp.float32) - ref.astype(jnp.float32))))
    assert err < 1e-2, f"max abs err {err}"

    print("KERNEL_OK")
</pallas_src>

<mosaic_0001>
module attributes {stable_mosaic.version = 11 : i64} {
  func.func @_fused_fc_kernel(%arg0: i32, %arg1: i32, %arg2: memref<34xf32, #tpu.memory_space<smem>>, %arg3: memref<13xf32, #tpu.memory_space<smem>>, %arg4: memref<1x4x2x128xbf16, #tpu.memory_space<vmem>>, %arg5: memref<1x8x2x128xbf16, #tpu.memory_space<vmem>>) attributes {dimension_semantics = [#tpu.dimension_semantics<parallel>, #tpu.dimension_semantics<parallel>], iteration_bounds = array<i64: 2, 1>, scalar_prefetch = 0 : i64, scratch_operands = 0 : i64, tpu.core_type = #tpu.core_type<tc>, window_params = [{transform_indices = @transform_0, window_bounds = array<i64: 34>}, {transform_indices = @transform_1, window_bounds = array<i64: 13>}, {transform_indices = @transform_2, window_bounds = array<i64: 1, 4, 2, 128>}, {transform_indices = @transform_3, window_bounds = array<i64: 1, 8, 2, 128>}]} {
    %c0 = arith.constant 0 : index
    %c0_0 = arith.constant 0 : index
    %c0_1 = arith.constant 0 : index
    %c0_2 = arith.constant 0 : index
    %0 = vector.load %arg4[%c0, %c0_0, %c0_1, %c0_2] : memref<1x4x2x128xbf16, #tpu.memory_space<vmem>>, vector<1x1x2x128xbf16>
    %1 = vector.shape_cast %0 : vector<1x1x2x128xbf16> to vector<2x128xbf16>
    %2 = arith.extf %1 : vector<2x128xbf16> to vector<2x128xf32>
    %c0_3 = arith.constant 0 : index
    %c1 = arith.constant 1 : index
    %c0_4 = arith.constant 0 : index
    %c0_5 = arith.constant 0 : index
    %3 = vector.load %arg4[%c0_3, %c1, %c0_4, %c0_5] : memref<1x4x2x128xbf16, #tpu.memory_space<vmem>>, vector<1x1x2x128xbf16>
    %4 = vector.shape_cast %3 : vector<1x1x2x128xbf16> to vector<2x128xbf16>
    %5 = arith.extf %4 : vector<2x128xbf16> to vector<2x128xf32>
    %c0_6 = arith.constant 0 : index
    %c2 = arith.constant 2 : index
    %c0_7 = arith.constant 0 : index
    %c0_8 = arith.constant 0 : index
    %6 = vector.load %arg4[%c0_6, %c2, %c0_7, %c0_8] : memref<1x4x2x128xbf16, #tpu.memory_space<vmem>>, vector<1x1x2x128xbf16>
    %7 = vector.shape_cast %6 : vector<1x1x2x128xbf16> to vector<2x128xbf16>
    %8 = arith.extf %7 : vector<2x128xbf16> to vector<2x128xf32>
    %c0_9 = arith.constant 0 : index
    %c3 = arith.constant 3 : index
    %c0_10 = arith.constant 0 : index
    %c0_11 = arith.constant 0 : index
    %9 = vector.load %arg4[%c0_9, %c3, %c0_10, %c0_11] : memref<1x4x2x128xbf16, #tpu.memory_space<vmem>>, vector<1x1x2x128xbf16>
    %10 = vector.shape_cast %9 : vector<1x1x2x128xbf16> to vector<2x128xbf16>
    %11 = arith.extf %10 : vector<2x128xbf16> to vector<2x128xf32>
    %c0_12 = arith.constant 0 : index
    %12 = memref.load %arg2[%c0_12] : memref<34xf32, #tpu.memory_space<smem>>
    %13 = vector.broadcast %12 : f32 to vector<2x128xf32>
    %14 = arith.mulf %2, %13 : vector<2x128xf32>
    %c1_13 = arith.constant 1 : index
    %15 = memref.load %arg2[%c1_13] : memref<34xf32, #tpu.memory_space<smem>>
    %16 = vector.broadcast %15 : f32 to vector<2x128xf32>
    %17 = arith.mulf %5, %16 : vector<2x128xf32>
    %18 = arith.addf %14, %17 : vector<2x128xf32>
    %c2_14 = arith.constant 2 : index
    %19 = memref.load %arg2[%c2_14] : memref<34xf32, #tpu.memory_space<smem>>
    %20 = vector.broadcast %19 : f32 to vector<2x128xf32>
    %21 = arith.mulf %8, %20 : vector<2x128xf32>
    %22 = arith.addf %18, %21 : vector<2x128xf32>
    %c3_15 = arith.constant 3 : index
    %23 = memref.load %arg2[%c3_15] : memref<34xf32, #tpu.memory_space<smem>>
    %24 = vector.broadcast %23 : f32 to vector<2x128xf32>
    %25 = arith.mulf %11, %24 : vector<2x128xf32>
    %26 = arith.addf %22, %25 : vector<2x128xf32>
    %c0_16 = arith.constant 0 : index
    %27 = memref.load %arg3[%c0_16] : memref<13xf32, #tpu.memory_space<smem>>
    %28 = vector.broadcast %27 : f32 to vector<2x128xf32>
    %29 = arith.addf %26, %28 : vector<2x128xf32>
    %cst = arith.constant 0.000000e+00 : f32
    %30 = vector.broadcast %cst : f32 to vector<2x128xf32>
    %31 = arith.cmpf oge, %29, %30 : vector<2x128xf32>
    %cst_17 = arith.constant 0.00999999977 : f32
    %32 = vector.broadcast %cst_17 : f32 to vector<2x128xf32>
    %33 = arith.mulf %32, %29 : vector<2x128xf32>
    %34 = arith.select %31, %29, %33 : vector<2x128xi1>, vector<2x128xf32>
    %35 = arith.truncf %34 : vector<2x128xf32> to vector<2x128xbf16>
    %36 = arith.extf %35 : vector<2x128xbf16> to vector<2x128xf32>
    %c4 = arith.constant 4 : index
    %37 = memref.load %arg2[%c4] : memref<34xf32, #tpu.memory_space<smem>>
    %38 = vector.broadcast %37 : f32 to vector<2x128xf32>
    %39 = arith.mulf %2, %38 : vector<2x128xf32>
    %c5 = arith.constant 5 : index
    %40 = memref.load %arg2[%c5] : memref<34xf32, #tpu.memory_space<smem>>
    %41 = vector.broadcast %40 : f32 to vector<2x128xf32>
    %42 = arith.mulf %5, %41 : vector<2x128xf32>
    %43 = arith.addf %39, %42 : vector<2x128xf32>
    %c6 = arith.constant 6 : index
    %44 = memref.load %arg2[%c6] : memref<34xf32, #tpu.memory_space<smem>>
    %45 = vector.broadcast %44 : f32 to vector<2x128xf32>
    %46 = arith.mulf %8, %45 : vector<2x128xf32>
    %47 = arith.addf %43, %46 : vector<2x128xf32>
    %c7 = arith.constant 7 : index
    %48 = memref.load %arg2[%c7] : memref<34xf32, #tpu.memory_space<smem>>
    %49 = vector.broadcast %48 : f32 to vector<2x128xf32>
    %50 = arith.mulf %11, %49 : vector<2x128xf32>
    %51 = arith.addf %47, %50 : vector<2x128xf32>
    %c1_18 = arith.constant 1 : index
    %52 = memref.load %arg3[%c1_18] : memref<13xf32, #tpu.memory_space<smem>>
    %53 = vector.broadcast %52 : f32 to vector<2x128xf32>
    %54 = arith.addf %51, %53 : vector<2x128xf32>
    %cst_19 = arith.constant 0.000000e+00 : f32
    %55 = vector.broadcast %cst_19 : f32 to vector<2x128xf32>
    %56 = arith.cmpf oge, %54, %55 : vector<2x128xf32>
    %cst_20 = arith.constant 0.00999999977 : f32
    %57 = vector.broadcast %cst_20 : f32 to vector<2x128xf32>
    %58 = arith.mulf %57, %54 : vector<2x128xf32>
    %59 = arith.select %56, %54, %58 : vector<2x128xi1>, vector<2x128xf32>
    %60 = arith.truncf %59 : vector<2x128xf32> to vector<2x128xbf16>
    %61 = arith.extf %60 : vector<2x128xbf16> to vector<2x128xf32>
    %c8 = arith.constant 8 : index
    %62 = memref.load %arg2[%c8] : memref<34xf32, #tpu.memory_space<smem>>
    %63 = vector.broadcast %62 : f32 to vector<2x128xf32>
    %64 = arith.mulf %2, %63 : vector<2x128xf32>
    %c9 = arith.constant 9 : index
    %65 = memref.load %arg2[%c9] : memref<34xf32, #tpu.memory_space<smem>>
    %66 = vector.broadcast %65 : f32 to vector<2x128xf32>
    %67 = arith.mulf %5, %66 : vector<2x128xf32>
    %68 = arith.addf %64, %67 : vector<2x128xf32>
    %c10 = arith.constant 10 : index
    %69 = memref.load %arg2[%c10] : memref<34xf32, #tpu.memory_space<smem>>
    %70 = vector.broadcast %69 : f32 to vector<2x128xf32>
    %71 = arith.mulf %8, %70 : vector<2x128xf32>
    %72 = arith.addf %68, %71 : vector<2x128xf32>
    %c11 = arith.constant 11 : index
    %73 = memref.load %arg2[%c11] : memref<34xf32, #tpu.memory_space<smem>>
    %74 = vector.broadcast %73 : f32 to vector<2x128xf32>
    %75 = arith.mulf %11, %74 : vector<2x128xf32>
    %76 = arith.addf %72, %75 : vector<2x128xf32>
    %c2_21 = arith.constant 2 : index
    %77 = memref.load %arg3[%c2_21] : memref<13xf32, #tpu.memory_space<smem>>
    %78 = vector.broadcast %77 : f32 to vector<2x128xf32>
    %79 = arith.addf %76, %78 : vector<2x128xf32>
    %cst_22 = arith.constant 0.000000e+00 : f32
    %80 = vector.broadcast %cst_22 : f32 to vector<2x128xf32>
    %81 = arith.cmpf oge, %79, %80 : vector<2x128xf32>
    %cst_23 = arith.constant 0.00999999977 : f32
    %82 = vector.broadcast %cst_23 : f32 to vector<2x128xf32>
    %83 = arith.mulf %82, %79 : vector<2x128xf32>
    %84 = arith.select %81, %79, %83 : vector<2x128xi1>, vector<2x128xf32>
    %85 = arith.truncf %84 : vector<2x128xf32> to vector<2x128xbf16>
    %86 = arith.extf %85 : vector<2x128xbf16> to vector<2x128xf32>
    %c12 = arith.constant 12 : index
    %87 = memref.load %arg2[%c12] : memref<34xf32, #tpu.memory_space<smem>>
    %88 = vector.broadcast %87 : f32 to vector<2x128xf32>
    %89 = arith.mulf %36, %88 : vector<2x128xf32>
    %c13 = arith.constant 13 : index
    %90 = memref.load %arg2[%c13] : memref<34xf32, #tpu.memory_space<smem>>
    %91 = vector.broadcast %90 : f32 to vector<2x128xf32>
    %92 = arith.mulf %61, %91 : vector<2x128xf32>
    %93 = arith.addf %89, %92 : vector<2x128xf32>
    %c14 = arith.constant 14 : index
    %94 = memref.load %arg2[%c14] : memref<34xf32, #tpu.memory_space<smem>>
    %95 = vector.broadcast %94 : f32 to vector<2x128xf32>
    %96 = arith.mulf %86, %95 : vector<2x128xf32>
    %97 = arith.addf %93, %96 : vector<2x128xf32>
    %c3_24 = arith.constant 3 : index
    %98 = memref.load %arg3[%c3_24] : memref<13xf32, #tpu.memory_space<smem>>
    %99 = vector.broadcast %98 : f32 to vector<2x128xf32>
    %100 = arith.addf %97, %99 : vector<2x128xf32>
    %cst_25 = arith.constant 0.000000e+00 : f32
    %101 = vector.broadcast %cst_25 : f32 to vector<2x128xf32>
    %102 = arith.cmpf oge, %100, %101 : vector<2x128xf32>
    %cst_26 = arith.constant 0.00999999977 : f32
    %103 = vector.broadcast %cst_26 : f32 to vector<2x128xf32>
    %104 = arith.mulf %103, %100 : vector<2x128xf32>
    %105 = arith.select %102, %100, %104 : vector<2x128xi1>, vector<2x128xf32>
    %106 = arith.truncf %105 : vector<2x128xf32> to vector<2x128xbf16>
    %107 = arith.extf %106 : vector<2x128xbf16> to vector<2x128xf32>
    %c15 = arith.constant 15 : index
    %108 = memref.load %arg2[%c15] : memref<34xf32, #tpu.memory_space<smem>>
    %109 = vector.broadcast %108 : f32 to vector<2x128xf32>
    %110 = arith.mulf %36, %109 : vector<2x128xf32>
    %c16 = arith.constant 16 : index
    %111 = memref.load %arg2[%c16] : memref<34xf32, #tpu.memory_space<smem>>
    %112 = vector.broadcast %111 : f32 to vector<2x128xf32>
    %113 = arith.mulf %61, %112 : vector<2x128xf32>
    %114 = arith.addf %110, %113 : vector<2x128xf32>
    %c17 = arith.constant 17 : index
    %115 = memref.load %arg2[%c17] : memref<34xf32, #tpu.memory_space<smem>>
    %116 = vector.broadcast %115 : f32 to vector<2x128xf32>
    %117 = arith.mulf %86, %116 : vector<2x128xf32>
    %118 = arith.addf %114, %117 : vector<2x128xf32>
    %c4_27 = arith.constant 4 : index
    %119 = memref.load %arg3[%c4_27] : memref<13xf32, #tpu.memory_space<smem>>
    %120 = vector.broadcast %119 : f32 to vector<2x128xf32>
    %121 = arith.addf %118, %120 : vector<2x128xf32>
    %cst_28 = arith.constant 0.000000e+00 : f32
    %122 = vector.broadcast %cst_28 : f32 to vector<2x128xf32>
    %123 = arith.cmpf oge, %121, %122 : vector<2x128xf32>
    %cst_29 = arith.constant 0.00999999977 : f32
    %124 = vector.broadcast %cst_29 : f32 to vector<2x128xf32>
    %125 = arith.mulf %124, %121 : vector<2x128xf32>
    %126 = arith.select %123, %121, %125 : vector<2x128xi1>, vector<2x128xf32>
    %127 = arith.truncf %126 : vector<2x128xf32> to vector<2x128xbf16>
    %128 = arith.extf %127 : vector<2x128xbf16> to vector<2x128xf32>
    %c18 = arith.constant 18 : index
    %129 = memref.load %arg2[%c18] : memref<34xf32, #tpu.memory_space<smem>>
    %130 = vector.broadcast %129 : f32 to vector<2x128xf32>
    %131 = arith.mulf %107, %130 : vector<2x128xf32>
    %c19 = arith.constant 19 : index
    %132 = memref.load %arg2[%c19] : memref<34xf32, #tpu.memory_space<smem>>
    %133 = vector.broadcast %132 : f32 to vector<2x128xf32>
    %134 = arith.mulf %128, %133 : vector<2x128xf32>
    %135 = arith.addf %131, %134 : vector<2x128xf32>
    %c5_30 = arith.constant 5 : index
    %136 = memref.load %arg3[%c5_30] : memref<13xf32, #tpu.memory_space<smem>>
    %137 = vector.broadcast %136 : f32 to vector<2x128xf32>
    %138 = arith.addf %135, %137 : vector<2x128xf32>
    %c20 = arith.constant 20 : index
    %139 = memref.load %arg2[%c20] : memref<34xf32, #tpu.memory_space<smem>>
    %140 = vector.broadcast %139 : f32 to vector<2x128xf32>
    %141 = arith.mulf %107, %140 : vector<2x128xf32>
    %c21 = arith.constant 21 : index
    %142 = memref.load %arg2[%c21] : memref<34xf32, #tpu.memory_space<smem>>
    %143 = vector.broadcast %142 : f32 to vector<2x128xf32>
    %144 = arith.mulf %128, %143 : vector<2x128xf32>
    %145 = arith.addf %141, %144 : vector<2x128xf32>
    %c6_31 = arith.constant 6 : index
    %146 = memref.load %arg3[%c6_31] : memref<13xf32, #tpu.memory_space<smem>>
    %147 = vector.broadcast %146 : f32 to vector<2x128xf32>
    %148 = arith.addf %145, %147 : vector<2x128xf32>
    %c22 = arith.constant 22 : index
    %149 = memref.load %arg2[%c22] : memref<34xf32, #tpu.memory_space<smem>>
    %150 = vector.broadcast %149 : f32 to vector<2x128xf32>
    %151 = arith.mulf %107, %150 : vector<2x128xf32>
    %c23 = arith.constant 23 : index
    %152 = memref.load %arg2[%c23] : memref<34xf32, #tpu.memory_space<smem>>
    %153 = vector.broadcast %152 : f32 to vector<2x128xf32>
    %154 = arith.mulf %128, %153 : vector<2x128xf32>
    %155 = arith.addf %151, %154 : vector<2x128xf32>
    %c7_32 = arith.constant 7 : index
    %156 = memref.load %arg3[%c7_32] : memref<13xf32, #tpu.memory_space<smem>>
    %157 = vector.broadcast %156 : f32 to vector<2x128xf32>
    %158 = arith.addf %155, %157 : vector<2x128xf32>
    %c24 = arith.constant 24 : index
    %159 = memref.load %arg2[%c24] : memref<34xf32, #tpu.memory_space<smem>>
    %160 = vector.broadcast %159 : f32 to vector<2x128xf32>
    %161 = arith.mulf %107, %160 : vector<2x128xf32>
    %c25 = arith.constant 25 : index
    %162 = memref.load %arg2[%c25] : memref<34xf32, #tpu.memory_space<smem>>
    %163 = vector.broadcast %162 : f32 to vector<2x128xf32>
    %164 = arith.mulf %128, %163 : vector<2x128xf32>
    %165 = arith.addf %161, %164 : vector<2x128xf32>
    %c8_33 = arith.constant 8 : index
    %166 = memref.load %arg3[%c8_33] : memref<13xf32, #tpu.memory_space<smem>>
    %167 = vector.broadcast %166 : f32 to vector<2x128xf32>
    %168 = arith.addf %165, %167 : vector<2x128xf32>
    %c26 = arith.constant 26 : index
    %169 = memref.load %arg2[%c26] : memref<34xf32, #tpu.memory_space<smem>>
    %170 = vector.broadcast %169 : f32 to vector<2x128xf32>
    %171 = arith.mulf %107, %170 : vector<2x128xf32>
    %c27 = arith.constant 27 : index
    %172 = memref.load %arg2[%c27] : memref<34xf32, #tpu.memory_space<smem>>
    %173 = vector.broadcast %172 : f32 to vector<2x128xf32>
    %174 = arith.mulf %128, %173 : vector<2x128xf32>
    %175 = arith.addf %171, %174 : vector<2x128xf32>
    %c9_34 = arith.constant 9 : index
    %176 = memref.load %arg3[%c9_34] : memref<13xf32, #tpu.memory_space<smem>>
    %177 = vector.broadcast %176 : f32 to vector<2x128xf32>
    %178 = arith.addf %175, %177 : vector<2x128xf32>
    %c28 = arith.constant 28 : index
    %179 = memref.load %arg2[%c28] : memref<34xf32, #tpu.memory_space<smem>>
    %180 = vector.broadcast %179 : f32 to vector<2x128xf32>
    %181 = arith.mulf %107, %180 : vector<2x128xf32>
    %c29 = arith.constant 29 : index
    %182 = memref.load %arg2[%c29] : memref<34xf32, #tpu.memory_space<smem>>
    %183 = vector.broadcast %182 : f32 to vector<2x128xf32>
    %184 = arith.mulf %128, %183 : vector<2x128xf32>
    %185 = arith.addf %181, %184 : vector<2x128xf32>
    %c10_35 = arith.constant 10 : index
    %186 = memref.load %arg3[%c10_35] : memref<13xf32, #tpu.memory_space<smem>>
    %187 = vector.broadcast %186 : f32 to vector<2x128xf32>
    %188 = arith.addf %185, %187 : vector<2x128xf32>
    %c30 = arith.constant 30 : index
    %189 = memref.load %arg2[%c30] : memref<34xf32, #tpu.memory_space<smem>>
    %190 = vector.broadcast %189 : f32 to vector<2x128xf32>
    %191 = arith.mulf %107, %190 : vector<2x128xf32>
    %c31 = arith.constant 31 : index
    %192 = memref.load %arg2[%c31] : memref<34xf32, #tpu.memory_space<smem>>
    %193 = vector.broadcast %192 : f32 to vector<2x128xf32>
    %194 = arith.mulf %128, %193 : vector<2x128xf32>
    %195 = arith.addf %191, %194 : vector<2x128xf32>
    %c11_36 = arith.constant 11 : index
    %196 = memref.load %arg3[%c11_36] : memref<13xf32, #tpu.memory_space<smem>>
    %197 = vector.broadcast %196 : f32 to vector<2x128xf32>
    %198 = arith.addf %195, %197 : vector<2x128xf32>
    %c32 = arith.constant 32 : index
    %199 = memref.load %arg2[%c32] : memref<34xf32, #tpu.memory_space<smem>>
    %200 = vector.broadcast %199 : f32 to vector<2x128xf32>
    %201 = arith.mulf %107, %200 : vector<2x128xf32>
    %c33 = arith.constant 33 : index
    %202 = memref.load %arg2[%c33] : memref<34xf32, #tpu.memory_space<smem>>
    %203 = vector.broadcast %202 : f32 to vector<2x128xf32>
    %204 = arith.mulf %128, %203 : vector<2x128xf32>
    %205 = arith.addf %201, %204 : vector<2x128xf32>
    %c12_37 = arith.constant 12 : index
    %206 = memref.load %arg3[%c12_37] : memref<13xf32, #tpu.memory_space<smem>>
    %207 = vector.broadcast %206 : f32 to vector<2x128xf32>
    %208 = arith.addf %205, %207 : vector<2x128xf32>
    %209 = arith.truncf %138 : vector<2x128xf32> to vector<2x128xbf16>
    %c0_38 = arith.constant 0 : index
    %c0_39 = arith.constant 0 : index
    %c0_40 = arith.constant 0 : index
    %c0_41 = arith.constant 0 : index
    %210 = vector.load %arg5[%c0_38, %c0_39, %c0_40, %c0_41] : memref<1x8x2x128xbf16, #tpu.memory_space<vmem>>, vector<1x1x2x128xbf16>
    %211 = vector.shape_cast %210 : vector<1x1x2x128xbf16> to vector<2x128xbf16>
    %212 = vector.shape_cast %209 : vector<2x128xbf16> to vector<1x1x2x128xbf16>
    tpu.vector_store %arg5[%c0_38, %c0_39, %c0_40, %c0_41], %212 {strides = array<i32>} : memref<1x8x2x128xbf16, #tpu.memory_space<vmem>>, vector<1x1x2x128xbf16>,
    %213 = arith.truncf %148 : vector<2x128xf32> to vector<2x128xbf16>
    %c0_42 = arith.constant 0 : index
    %c1_43 = arith.constant 1 : index
    %c0_44 = arith.constant 0 : index
    %c0_45 = arith.constant 0 : index
    %214 = vector.load %arg5[%c0_42, %c1_43, %c0_44, %c0_45] : memref<1x8x2x128xbf16, #tpu.memory_space<vmem>>, vector<1x1x2x128xbf16>
    %215 = vector.shape_cast %214 : vector<1x1x2x128xbf16> to vector<2x128xbf16>
    %216 = vector.shape_cast %213 : vector<2x128xbf16> to vector<1x1x2x128xbf16>
    tpu.vector_store %arg5[%c0_42, %c1_43, %c0_44, %c0_45], %216 {strides = array<i32>} : memref<1x8x2x128xbf16, #tpu.memory_space<vmem>>, vector<1x1x2x128xbf16>,
    %217 = arith.truncf %158 : vector<2x128xf32> to vector<2x128xbf16>
    %c0_46 = arith.constant 0 : index
    %c2_47 = arith.constant 2 : index
    %c0_48 = arith.constant 0 : index
    %c0_49 = arith.constant 0 : index
    %218 = vector.load %arg5[%c0_46, %c2_47, %c0_48, %c0_49] : memref<1x8x2x128xbf16, #tpu.memory_space<vmem>>, vector<1x1x2x128xbf16>
    %219 = vector.shape_cast %218 : vector<1x1x2x128xbf16> to vector<2x128xbf16>
    %220 = vector.shape_cast %217 : vector<2x128xbf16> to vector<1x1x2x128xbf16>
    tpu.vector_store %arg5[%c0_46, %c2_47, %c0_48, %c0_49], %220 {strides = array<i32>} : memref<1x8x2x128xbf16, #tpu.memory_space<vmem>>, vector<1x1x2x128xbf16>,
    %221 = arith.truncf %168 : vector<2x128xf32> to vector<2x128xbf16>
    %c0_50 = arith.constant 0 : index
    %c3_51 = arith.constant 3 : index
    %c0_52 = arith.constant 0 : index
    %c0_53 = arith.constant 0 : index
    %222 = vector.load %arg5[%c0_50, %c3_51, %c0_52, %c0_53] : memref<1x8x2x128xbf16, #tpu.memory_space<vmem>>, vector<1x1x2x128xbf16>
    %223 = vector.shape_cast %222 : vector<1x1x2x128xbf16> to vector<2x128xbf16>
    %224 = vector.shape_cast %221 : vector<2x128xbf16> to vector<1x1x2x128xbf16>
    tpu.vector_store %arg5[%c0_50, %c3_51, %c0_52, %c0_53], %224 {strides = array<i32>} : memref<1x8x2x128xbf16, #tpu.memory_space<vmem>>, vector<1x1x2x128xbf16>,
    %225 = arith.truncf %178 : vector<2x128xf32> to vector<2x128xbf16>
    %c0_54 = arith.constant 0 : index
    %c4_55 = arith.constant 4 : index
    %c0_56 = arith.constant 0 : index
    %c0_57 = arith.constant 0 : index
    %226 = vector.load %arg5[%c0_54, %c4_55, %c0_56, %c0_57] : memref<1x8x2x128xbf16, #tpu.memory_space<vmem>>, vector<1x1x2x128xbf16>
    %227 = vector.shape_cast %226 : vector<1x1x2x128xbf16> to vector<2x128xbf16>
    %228 = vector.shape_cast %225 : vector<2x128xbf16> to vector<1x1x2x128xbf16>
    tpu.vector_store %arg5[%c0_54, %c4_55, %c0_56, %c0_57], %228 {strides = array<i32>} : memref<1x8x2x128xbf16, #tpu.memory_space<vmem>>, vector<1x1x2x128xbf16>,
    %229 = arith.truncf %188 : vector<2x128xf32> to vector<2x128xbf16>
    %c0_58 = arith.constant 0 : index
    %c5_59 = arith.constant 5 : index
    %c0_60 = arith.constant 0 : index
    %c0_61 = arith.constant 0 : index
    %230 = vector.load %arg5[%c0_58, %c5_59, %c0_60, %c0_61] : memref<1x8x2x128xbf16, #tpu.memory_space<vmem>>, vector<1x1x2x128xbf16>
    %231 = vector.shape_cast %230 : vector<1x1x2x128xbf16> to vector<2x128xbf16>
    %232 = vector.shape_cast %229 : vector<2x128xbf16> to vector<1x1x2x128xbf16>
    tpu.vector_store %arg5[%c0_58, %c5_59, %c0_60, %c0_61], %232 {strides = array<i32>} : memref<1x8x2x128xbf16, #tpu.memory_space<vmem>>, vector<1x1x2x128xbf16>,
    %233 = arith.truncf %198 : vector<2x128xf32> to vector<2x128xbf16>
    %c0_62 = arith.constant 0 : index
    %c6_63 = arith.constant 6 : index
    %c0_64 = arith.constant 0 : index
    %c0_65 = arith.constant 0 : index
    %234 = vector.load %arg5[%c0_62, %c6_63, %c0_64, %c0_65] : memref<1x8x2x128xbf16, #tpu.memory_space<vmem>>, vector<1x1x2x128xbf16>
    %235 = vector.shape_cast %234 : vector<1x1x2x128xbf16> to vector<2x128xbf16>
    %236 = vector.shape_cast %233 : vector<2x128xbf16> to vector<1x1x2x128xbf16>
    tpu.vector_store %arg5[%c0_62, %c6_63, %c0_64, %c0_65], %236 {strides = array<i32>} : memref<1x8x2x128xbf16, #tpu.memory_space<vmem>>, vector<1x1x2x128xbf16>,
    %237 = arith.truncf %208 : vector<2x128xf32> to vector<2x128xbf16>
    %c0_66 = arith.constant 0 : index
    %c7_67 = arith.constant 7 : index
    %c0_68 = arith.constant 0 : index
    %c0_69 = arith.constant 0 : index
    %238 = vector.load %arg5[%c0_66, %c7_67, %c0_68, %c0_69] : memref<1x8x2x128xbf16, #tpu.memory_space<vmem>>, vector<1x1x2x128xbf16>
    %239 = vector.shape_cast %238 : vector<1x1x2x128xbf16> to vector<2x128xbf16>
    %240 = vector.shape_cast %237 : vector<2x128xbf16> to vector<1x1x2x128xbf16>
    tpu.vector_store %arg5[%c0_66, %c7_67, %c0_68, %c0_69], %240 {strides = array<i32>} : memref<1x8x2x128xbf16, #tpu.memory_space<vmem>>, vector<1x1x2x128xbf16>,
    return
  }
  func.func @transform_0(%arg0: i32, %arg1: i32) -> i32 {
    %c0_i32 = arith.constant 0 : i32
    %c0_i32_0 = arith.constant 0 : i32
    return %c0_i32 : i32
  }
  func.func @transform_1(%arg0: i32, %arg1: i32) -> i32 {
    %c0_i32 = arith.constant 0 : i32
    %c0_i32_0 = arith.constant 0 : i32
    return %c0_i32 : i32
  }
  func.func @transform_2(%arg0: i32, %arg1: i32) -> (i32, i32, i32, i32) {
    %c0_i32 = arith.constant 0 : i32
    %c0_i32_0 = arith.constant 0 : i32
    %c0_i32_1 = arith.constant 0 : i32
    return %arg0, %c0_i32, %arg1, %c0_i32_0 : i32, i32, i32, i32
  }
  func.func @transform_3(%arg0: i32, %arg1: i32) -> (i32, i32, i32, i32) {
    %c0_i32 = arith.constant 0 : i32
    %c0_i32_0 = arith.constant 0 : i32
    %c0_i32_1 = arith.constant 0 : i32
    return %arg0, %c0_i32, %arg1, %c0_i32_0 : i32, i32, i32, i32
  }
}

</mosaic_0001>

<llo_original>
// kernel: tpu_custom_call.1
$region0: #{tpu_custom_call.1}
  #allocation0 [shape = 'u32[]', space=smem, size = 0x4, offset = 0x4, fixed_abs, tag = 'smem constant byte address 0x4 - core index']
  #allocation1 [shape = 'u32[144,128]{1,0:T(1,128)}', space=vmem, size = 0x12000, scoped, tag = 'internal scratch']
  %s0 = inlined_call_operand.hbm [shape: f32[34], index: 0, kind: input, shape index: {}]
  %s1 = inlined_call_operand.vmem [shape: f32[13], index: 1, kind: input, shape index: {}]
  %s2 = inlined_call_operand.hbm [shape: bf16[2,4,2,128], index: 2, kind: input, shape index: {}]
  %s3 = inlined_call_operand.hbm [shape: bf16[2,8,2,128], index: 3, kind: output, shape index: {}]
  %s4 = sld [smem:[#allocation0]]
  $region57: #{tpu_custom_call.1} parent=0
    _
  %s6 = ssub.s32 1, %s4
  %s7 = scalar_select 0, %s6, %s4
  $region1: #{tpu_custom_call.1} parent=0
    #allocation2 [shape = 'u8[512]{0}', space=smem, size = 0x200, scoped, tag = 'input window, operand 0, single buffered']
    #allocation3 [shape = 's32[2]{0}', space=sflag, size = 0x8, scoped, tag = 'scoped memory for tpu_custom_call.1']
    #allocation4 [shape = 's32[2]{0}', space=sflag, size = 0x8, scoped, tag = 'scoped memory for tpu_custom_call.1']
    #allocation5 [shape = 's32[2]{0}', space=sflag, size = 0x8, scoped, tag = 'scoped memory for tpu_custom_call.1']
    #allocation6 [shape = 's32[2]{0}', space=sflag, size = 0x8, scoped, tag = 'scoped memory for tpu_custom_call.1']
    #allocation7 [shape = 'u8[512]{0}', space=smem, size = 0x200, scoped, tag = 'input window, operand 1, single buffered']
    #allocation8 [shape = 'u8[4096]{0}', space=vmem, size = 0x1000, scoped, tag = 'input window, operand 2']
    #allocation9 [shape = 'u8[8192]{0}', space=vmem, size = 0x2000, scoped, tag = 'output window, operand 0']
    %8 = vsyncpa [#allocation5], 0
    %9 = vsyncpa [#allocation6], 0
    %10 = vsyncpa [#allocation3], 0
    %s11 = scalar_lea.sflag [#allocation3], 1
    %12 = vsyncpa %s11, 0
    %13 = vsyncpa [#allocation4], 0
    %s14 = scalar_lea.sflag [#allocation4], 1
    %15 = vsyncpa %s14, 0
    loop: start=0, step=1, limit=4
    $region2: #{tpu_custom_call.1} parent=1 // loop_pre_header
      _
    $region3: #{tpu_custom_call.1} parent=1 // loop_header
      %s17 = sphi 0, %s21
      %p18 = scmp.ge.s32.totalorder %s17, 4
      %s24 = sphi 0, %s36
      %s25 = sphi 0, %s32
      %s26 = sphi 0, %s24
      %s27 = sphi 0, %s25
      %s28 = sphi 0, %s26
      %s29 = sphi 0, %s27
      %s37 = sphi 0, %s37
      %s39 = sphi 0, %s37
      %s40 = sphi 0, %s39
      %s54 = sphi 0, %s40
      %s58 = sphi 0, %s58
      %s60 = sphi 0, %s58
      %s61 = sphi 0, %s60
      %s75 = sphi 0, %s61
      %s83 = sphi 0, %s85
      %s86 = sphi 0, %s83
      %s87 = sphi 0, %s86
      %s103 = sphi 0, %s87
      %s111 = sphi 0, %s113
      %s114 = sphi 0, %s111
      %s115 = sphi 0, %s114
      %s131 = sphi 0, %s115
    $region4: #{tpu_custom_call.1} parent=1 // loop_header_branch
      %20 = sbr.rel (%p18) target = $region8
    $region5: #{tpu_custom_call.1} parent=1 // loop_body
      %s22 = ssub.s32 %s17, 1
      %s23 = ssub.s32 %s17, 2
      %s30 = sadd.s32 1, %s25
      %p31 = scmp.ge.s32.totalorder %s30, 1
      %s32 = scalar_select %p31, 0, %s30
      %s33 = sadd.s32 1, %s24
      %s34 = scalar_select %p31, %s33, %s24
      %p35 = scmp.ge.s32.totalorder %s34, 2
      %s36 = scalar_select %p35, 0, %s34
      %s38 = sadd.s32 %s37, 1
      %p41 = scmp.eq.s32.totalorder %s17, 1
      %p42 = scmp.ne.s32.totalorder %s37, %s39
      %p43 = scmp.eq.s32.totalorder %s17, 0
      %p44 = por %p42, %p43
      %p45 = scmp.ne.s32.totalorder %s37, %s39
      %p46 = scmp.eq.s32.totalorder %s22, 1
      %p47 = por %p45, %p46
      %p48 = scmp.ne.s32.totalorder %s39, %s40
      %p49 = scmp.eq.s32.totalorder %s22, 0
      %p50 = por %p48, %p49
      %p51 = scmp.ne.s32.totalorder %s39, %s40
      %p52 = scmp.eq.s32.totalorder %s23, 1
      %p53 = por %p51, %p52
      %p55 = scmp.ne.s32.totalorder %s40, %s54
      %p56 = scmp.eq.s32.totalorder %s23, 0
      %p57 = por %p55, %p56
      %s59 = sadd.s32 %s58, 1
      %p62 = scmp.eq.s32.totalorder %s17, 1
      %p63 = scmp.ne.s32.totalorder %s58, %s60
      %p64 = scmp.eq.s32.totalorder %s17, 0
      %p65 = por %p63, %p64
      %p66 = scmp.ne.s32.totalorder %s58, %s60
      %p67 = scmp.eq.s32.totalorder %s22, 1
      %p68 = por %p66, %p67
      %p69 = scmp.ne.s32.totalorder %s60, %s61
      %p70 = scmp.eq.s32.totalorder %s22, 0
      %p71 = por %p69, %p70
      %p72 = scmp.ne.s32.totalorder %s60, %s61
      %p73 = scmp.eq.s32.totalorder %s23, 1
      %p74 = por %p72, %p73
      %p76 = scmp.ne.s32.totalorder %s61, %s75
      %p77 = scmp.eq.s32.totalorder %s23, 0
      %p78 = por %p76, %p77
      %s79 = ssub.s32 %s24, %s36
      %s80 = ssub.s32 %s25, %s32
      %s81 = sor.u32 %s79, %s80
      %p82 = scmp.eq.s32.totalorder %s81, 0
      %s84 = sadd.s32 %s83, 1
      %s85 = scalar_select %p82, %s83, %s84
      %p88 = pneg %p82
      %p89 = scmp.eq.s32.totalorder %s17, 1
      %p90 = por %p88, %p89
      %p91 = scmp.ne.s32.totalorder %s83, %s86
      %p92 = scmp.eq.s32.totalorder %s17, 0
      %p93 = por %p91, %p92
      %p94 = scmp.ne.s32.totalorder %s83, %s86
      %p95 = scmp.eq.s32.totalorder %s22, 1
      %p96 = por %p94, %p95
      %p97 = scmp.ne.s32.totalorder %s86, %s87
      %p98 = scmp.eq.s32.totalorder %s22, 0
      %p99 = por %p97, %p98
      %p100 = scmp.ne.s32.totalorder %s86, %s87
      %p101 = scmp.eq.s32.totalorder %s23, 1
      %p102 = por %p100, %p101
      %p104 = scmp.ne.s32.totalorder %s87, %s103
      %p105 = scmp.eq.s32.totalorder %s23, 0
      %p106 = por %p104, %p105
      %s107 = ssub.s32 %s24, %s36
      %s108 = ssub.s32 %s25, %s32
      %s109 = sor.u32 %s107, %s108
      %p110 = scmp.eq.s32.totalorder %s109, 0
      %s112 = sadd.s32 %s111, 1
      %s113 = scalar_select %p110, %s111, %s112
      %p116 = pneg %p110
      %p117 = scmp.eq.s32.totalorder %s17, 1
      %p118 = por %p116, %p117
      %p119 = scmp.ne.s32.totalorder %s111, %s114
      %p120 = scmp.eq.s32.totalorder %s17, 0
      %p121 = por %p119, %p120
      %p122 = scmp.ne.s32.totalorder %s111, %s114
      %p123 = scmp.eq.s32.totalorder %s22, 1
      %p124 = por %p122, %p123
      %p125 = scmp.ne.s32.totalorder %s114, %s115
      %p126 = scmp.eq.s32.totalorder %s22, 0
      %p127 = por %p125, %p126
      %p128 = scmp.ne.s32.totalorder %s114, %s115
      %p129 = scmp.eq.s32.totalorder %s23, 1
      %p130 = por %p128, %p129
      %p132 = scmp.ne.s32.totalorder %s115, %s131
      %p133 = scmp.eq.s32.totalorder %s23, 0
      %p134 = por %p132, %p133
      %p135 = scmp.le.s32.totalorder 1, %s17
      %p136 = scmp.lt.s32.totalorder %s17, 3
      %p137 = pnand %p135, %p136
      %p138 = pneg %p137
      // Predicated region
      $region9: #{tpu_custom_call.1} parent=5 // pred_check
        _
      $region10: #{tpu_custom_call.1} parent=5 // pred_check_branch
        %140 = sbr.rel (%p137) target = $region12
      $region11: #{tpu_custom_call.1} parent=5 // pred_region
        %s141 = ssub.s32 %s17, 1
        // Predicated region
        $region13: #{tpu_custom_call.1} parent=11 // pred_check
          %p142 = pneg %p50
        $region14: #{tpu_custom_call.1} parent=11 // pred_check_branch
          %144 = sbr.rel (%p142) target = $region16
        $region15: #{tpu_custom_call.1} parent=11 // pred_region
          %s146 = ssub.s32 16, 16
          %147 = vsyncadd [#allocation5], %s146
          %150 = dma.hbm_to_smem %s0, 16, [#allocation2], [#allocation5]
        $region16: #{tpu_custom_call.1} parent=11 // pred_fallthru
          _
        // Predicated region
        $region17: #{tpu_custom_call.1} parent=11 // pred_check
          %p151 = pneg %p71
        $region18: #{tpu_custom_call.1} parent=11 // pred_check_branch
          %153 = sbr.rel (%p151) target = $region20
        $region19: #{tpu_custom_call.1} parent=11 // pred_region
          %s155 = ssub.s32 16, 16
          %156 = vsyncadd [#allocation6], %s155
          %s158 = sshll.u32 %s1, 4
          %s159 = int_to_ptr.vmem [resolvable:$true] %s158
          %161 = dma.vmem_to_smem %s159, 16, [#allocation7], [#allocation6]
        $region20: #{tpu_custom_call.1} parent=11 // pred_fallthru
          _
      $region12: #{tpu_custom_call.1} parent=5 // pred_fallthru
        _
      %p162 = scmp.lt.s32.totalorder %s17, 2
      // Predicated region
      $region21: #{tpu_custom_call.1} parent=5 // pred_check
        %p163 = pneg %p162
      $region22: #{tpu_custom_call.1} parent=5 // pred_check_branch
        %165 = sbr.rel (%p163) target = $region24
      $region23: #{tpu_custom_call.1} parent=5 // pred_region
        // Predicated region
        $region25: #{tpu_custom_call.1} parent=23 // pred_check
          %p166 = pneg %p93
        $region26: #{tpu_custom_call.1} parent=23 // pred_check_branch
          %168 = sbr.rel (%p166) target = $region28
        $region27: #{tpu_custom_call.1} parent=23 // pred_region
          %s169 = sand.u32 %s83, 1
          %s170 = scalar_lea.sflag [#allocation3], %s169
          %s171 = sand.u32 %s83, 1
          %s172 = smul.addr %s171, 4
          %s173 = scalar_lea.vmem [#allocation8], %s172
          %s175 = ssub.s32 64, 64
          %176 = vsyncadd %s170, %s175
          %s177 = smul.addr %s24, 4
          %s178 = sadd.s32 %s25, %s177
          %s179 = smul.addr %s178, 16
          %s180 = scalar_lea.hbm %s2, %s179
          %s181 = sshll.u32 %s173, 4
          %s182 = int_to_ptr.vmem [resolvable:$true] %s181
          %187 = dma.hbm_to_vmem [thread:$0]  %s180, 64, %s182, %s170, 16, 16, 1
        $region28: #{tpu_custom_call.1} parent=23 // pred_fallthru
          _
      $region24: #{tpu_custom_call.1} parent=5 // pred_fallthru
        _
      %p188 = scmp.le.s32.totalorder 1, %s17
      %p189 = scmp.lt.s32.totalorder %s17, 3
      %p190 = pnand %p188, %p189
      %p191 = pneg %p190
      // Predicated region
      $region29: #{tpu_custom_call.1} parent=5 // pred_check
        _
      $region30: #{tpu_custom_call.1} parent=5 // pred_check_branch
        %193 = sbr.rel (%p190) target = $region32
      $region31: #{tpu_custom_call.1} parent=5 // pred_region
        %s194 = ssub.s32 %s17, 1
        // Predicated region
        $region33: #{tpu_custom_call.1} parent=31 // pred_check
          %p195 = pneg %p50
        $region34: #{tpu_custom_call.1} parent=31 // pred_check_branch
          %197 = sbr.rel (%p195) target = $region36
        $region35: #{tpu_custom_call.1} parent=31 // pred_region
          %198 = dma.done [#allocation5], 16
        $region36: #{tpu_custom_call.1} parent=31 // pred_fallthru
          _
        // Predicated region
        $region37: #{tpu_custom_call.1} parent=31 // pred_check
          %p199 = pneg %p71
        $region38: #{tpu_custom_call.1} parent=31 // pred_check_branch
          %201 = sbr.rel (%p199) target = $region40
        $region39: #{tpu_custom_call.1} parent=31 // pred_region
          %202 = dma.done [#allocation6], 16
        $region40: #{tpu_custom_call.1} parent=31 // pred_fallthru
          _
        %s203 = sand.u32 %s86, 1
        %s204 = scalar_lea.sflag [#allocation3], %s203
        %s205 = sand.u32 %s86, 1
        %s206 = smul.addr %s205, 4
        %s207 = scalar_lea.vmem [#allocation8], %s206
        // Predicated region
        $region41: #{tpu_custom_call.1} parent=31 // pred_check
          %p208 = pneg %p99
        $region42: #{tpu_custom_call.1} parent=31 // pred_check_branch
          %210 = sbr.rel (%p208) target = $region44
        $region43: #{tpu_custom_call.1} parent=31 // pred_region
          %211 = dma.done %s204, 64
        $region44: #{tpu_custom_call.1} parent=31 // pred_fallthru
          _
        %212 = sfence
        %p213 = pneg %p50
        %p214 = pneg %p47
        %p215 = pneg %p71
        %p216 = pneg %p68
        %s217 = sand.u32 %s86, 1
        %s218 = scalar_lea.sflag [#allocation3], %s217
        %s219 = sand.u32 %s86, 1
        %s220 = smul.addr %s219, 4
        %s221 = scalar_lea.vmem [#allocation8], %s220
        %p222 = pneg %p99
        %p223 = pneg %p96
        %p224 = pneg %p127
        %p225 = pneg %p124
        %s226 = sand.u32 %s114, 1
        %s227 = scalar_lea.sflag [#allocation4], %s226
        %s228 = sand.u32 %s114, 1
        %s229 = smul.addr %s228, 8
        %s230 = scalar_lea.vmem [#allocation9], %s229
        %v231 = vld [vmem:[%s207] sm:$0x1]
        %v232 = vunpack.c.l.bf16 %v231
        %s233 = scalar_lea.vmem %s207, 1 [#allocation8]
        %v234 = vld [vmem:[%s233] sm:$0x1]
        %v235 = vunpack.c.l.bf16 %v234
        %s236 = scalar_lea.vmem %s207, 2 [#allocation8]
        %v237 = vld [vmem:[%s236] sm:$0x1]
        %v238 = vunpack.c.l.bf16 %v237
        %s239 = scalar_lea.vmem %s207, 3 [#allocation8]
        %v240 = vld [vmem:[%s239] sm:$0x1]
        %v241 = vunpack.c.l.bf16 %v240
        %s242 = sld [smem:[#allocation2]]
        %v243 = vstv %s242
        %v244 = vmul.f32 %v232, %v243
        %s245 = sld [smem:[#allocation2 + $0x1]]
        %v246 = vstv %s245
        %v247 = vmul.f32 %v235, %v246
        %v248 = vadd.f32 %v244, %v247
        %s249 = sld [smem:[#allocation2 + $0x2]]
        %v250 = vstv %s249
        %v251 = vmul.f32 %v238, %v250
        %v252 = vadd.f32 %v248, %v251
        %s253 = sld [smem:[#allocation2 + $0x3]]
        %v254 = vstv %s253
        %v255 = vmul.f32 %v241, %v254
        %v256 = vadd.f32 %v252, %v255
        %s257 = sld [smem:[#allocation7]]
        %v258 = vstv %s257
        %v259 = vadd.f32 %v256, %v258
        %vm260 = vcmp.ge.f32.partialorder %v259, 0.0
        %v261 = vmul.f32 %v259, 0.01
        %v262 = vsel %vm260, %v259, %v261
        %v263 = vpack.c.bf16 %v262, %v262
        %v264 = vunpack.c.l.bf16 %v263
        %s265 = sld [smem:[#allocation2 + $0x4]]
        %v266 = vstv %s265
        %v267 = vmul.f32 %v232, %v266
        %s268 = sld [smem:[#allocation2 + $0x5]]
        %v269 = vstv %s268
        %v270 = vmul.f32 %v235, %v269
        %v271 = vadd.f32 %v267, %v270
        %s272 = sld [smem:[#allocation2 + $0x6]]
        %v273 = vstv %s272
        %v274 = vmul.f32 %v238, %v273
        %v275 = vadd.f32 %v271, %v274
        %s276 = sld [smem:[#allocation2 + $0x7]]
        %v277 = vstv %s276
        %v278 = vmul.f32 %v241, %v277
        %v279 = vadd.f32 %v275, %v278
        %s280 = sld [smem:[#allocation7 + $0x1]]
        %v281 = vstv %s280
        %v282 = vadd.f32 %v279, %v281
        %vm283 = vcmp.ge.f32.partialorder %v282, 0.0
        %v284 = vmul.f32 %v282, 0.01
        %v285 = vsel %vm283, %v282, %v284
        %v286 = vpack.c.bf16 %v285, %v285
        %v287 = vunpack.c.l.bf16 %v286
        %s288 = sld [smem:[#allocation2 + $0x8]]
        %v289 = vstv %s288
        %v290 = vmul.f32 %v232, %v289
        %s291 = sld [smem:[#allocation2 + $0x9]]
        %v292 = vstv %s291
        %v293 = vmul.f32 %v235, %v292
        %v294 = vadd.f32 %v290, %v293
        %s295 = sld [smem:[#allocation2 + $0xa]]
        %v296 = vstv %s295
        %v297 = vmul.f32 %v238, %v296
        %v298 = vadd.f32 %v294, %v297
        %s299 = sld [smem:[#allocation2 + $0xb]]
        %v300 = vstv %s299
        %v301 = vmul.f32 %v241, %v300
        %v302 = vadd.f32 %v298, %v301
        %s303 = sld [smem:[#allocation7 + $0x2]]
        %v304 = vstv %s303
        %v305 = vadd.f32 %v302, %v304
        %vm306 = vcmp.ge.f32.partialorder %v305, 0.0
        %v307 = vmul.f32 %v305, 0.01
        %v308 = vsel %vm306, %v305, %v307
        %v309 = vpack.c.bf16 %v308, %v308
        %v310 = vunpack.c.l.bf16 %v309
        %s311 = sld [smem:[#allocation2 + $0xc]]
        %v312 = vstv %s311
        %v313 = vmul.f32 %v264, %v312
        %s314 = sld [smem:[#allocation2 + $0xd]]
        %v315 = vstv %s314
        %v316 = vmul.f32 %v287, %v315
        %v317 = vadd.f32 %v313, %v316
        %s318 = sld [smem:[#allocation2 + $0xe]]
        %v319 = vstv %s318
        %v320 = vmul.f32 %v310, %v319
        %v321 = vadd.f32 %v317, %v320
        %s322 = sld [smem:[#allocation7 + $0x3]]
        %v323 = vstv %s322
        %v324 = vadd.f32 %v321, %v323
        %vm325 = vcmp.ge.f32.partialorder %v324, 0.0
        %v326 = vmul.f32 %v324, 0.01
        %v327 = vsel %vm325, %v324, %v326
        %v328 = vpack.c.bf16 %v327, %v327
        %v329 = vunpack.c.l.bf16 %v328
        %s330 = sld [smem:[#allocation2 + $0xf]]
        %v331 = vstv %s330
        %v332 = vmul.f32 %v264, %v331
        %s333 = sld [smem:[#allocation2 + $0x10]]
        %v334 = vstv %s333
        %v335 = vmul.f32 %v287, %v334
        %v336 = vadd.f32 %v332, %v335
        %s337 = sld [smem:[#allocation2 + $0x11]]
        %v338 = vstv %s337
        %v339 = vmul.f32 %v310, %v338
        %v340 = vadd.f32 %v336, %v339
        %s341 = sld [smem:[#allocation7 + $0x4]]
        %v342 = vstv %s341
        %v343 = vadd.f32 %v340, %v342
        %vm344 = vcmp.ge.f32.partialorder %v343, 0.0
        %v345 = vmul.f32 %v343, 0.01
        %v346 = vsel %vm344, %v343, %v345
        %v347 = vpack.c.bf16 %v346, %v346
        %v348 = vunpack.c.l.bf16 %v347
        %s349 = sld [smem:[#allocation2 + $0x12]]
        %v350 = vstv %s349
        %v351 = vmul.f32 %v329, %v350
        %s352 = sld [smem:[#allocation2 + $0x13]]
        %v353 = vstv %s352
        %v354 = vmul.f32 %v348, %v353
        %v355 = vadd.f32 %v351, %v354
        %s356 = sld [smem:[#allocation7 + $0x5]]
        %v357 = vstv %s356
        %v358 = vadd.f32 %v355, %v357
        %s359 = sld [smem:[#allocation2 + $0x14]]
        %v360 = vstv %s359
        %v361 = vmul.f32 %v329, %v360
        %s362 = sld [smem:[#allocation2 + $0x15]]
        %v363 = vstv %s362
        %v364 = vmul.f32 %v348, %v363
        %v365 = vadd.f32 %v361, %v364
        %s366 = sld [smem:[#allocation7 + $0x6]]
        %v367 = vstv %s366
        %v368 = vadd.f32 %v365, %v367
        %s369 = sld [smem:[#allocation2 + $0x16]]
        %v370 = vstv %s369
        %v371 = vmul.f32 %v329, %v370
        %s372 = sld [smem:[#allocation2 + $0x17]]
        %v373 = vstv %s372
        %v374 = vmul.f32 %v348, %v373
        %v375 = vadd.f32 %v371, %v374
        %s376 = sld [smem:[#allocation7 + $0x7]]
        %v377 = vstv %s376
        %v378 = vadd.f32 %v375, %v377
        %s379 = sld [smem:[#allocation2 + $0x18]]
        %v380 = vstv %s379
        %v381 = vmul.f32 %v329, %v380
        %s382 = sld [smem:[#allocation2 + $0x19]]
        %v383 = vstv %s382
        %v384 = vmul.f32 %v348, %v383
        %v385 = vadd.f32 %v381, %v384
        %s386 = sld [smem:[#allocation7 + $0x8]]
        %v387 = vstv %s386
        %v388 = vadd.f32 %v385, %v387
        %s389 = sld [smem:[#allocation2 + $0x1a]]
        %v390 = vstv %s389
        %v391 = vmul.f32 %v329, %v390
        %s392 = sld [smem:[#allocation2 + $0x1b]]
        %v393 = vstv %s392
        %v394 = vmul.f32 %v348, %v393
        %v395 = vadd.f32 %v391, %v394
        %s396 = sld [smem:[#allocation7 + $0x9]]
        %v397 = vstv %s396
        %v398 = vadd.f32 %v395, %v397
        %s399 = sld [smem:[#allocation2 + $0x1c]]
        %v400 = vstv %s399
        %v401 = vmul.f32 %v329, %v400
        %s402 = sld [smem:[#allocation2 + $0x1d]]
        %v403 = vstv %s402
        %v404 = vmul.f32 %v348, %v403
        %v405 = vadd.f32 %v401, %v404
        %s406 = sld [smem:[#allocation7 + $0xa]]
        %v407 = vstv %s406
        %v408 = vadd.f32 %v405, %v407
        %s409 = sld [smem:[#allocation2 + $0x1e]]
        %v410 = vstv %s409
        %v411 = vmul.f32 %v329, %v410
        %s412 = sld [smem:[#allocation2 + $0x1f]]
        %v413 = vstv %s412
        %v414 = vmul.f32 %v348, %v413
        %v415 = vadd.f32 %v411, %v414
        %s416 = sld [smem:[#allocation7 + $0xb]]
        %v417 = vstv %s416
        %v418 = vadd.f32 %v415, %v417
        %s419 = sld [smem:[#allocation2 + $0x20]]
        %v420 = vstv %s419
        %v421 = vmul.f32 %v329, %v420
        %s422 = sld [smem:[#allocation2 + $0x21]]
        %v423 = vstv %s422
        %v424 = vmul.f32 %v348, %v423
        %v425 = vadd.f32 %v421, %v424
        %s426 = sld [smem:[#allocation7 + $0xc]]
        %v427 = vstv %s426
        %v428 = vadd.f32 %v425, %v427
        %v429 = vpack.c.bf16 %v358, %v358
        %430 = vst [vmem:[%s230] sm:$0x1] %v429
        %v431 = vpack.c.bf16 %v368, %v368
        %s432 = scalar_lea.vmem %s230, 1 [#allocation9]
        %433 = vst [vmem:[%s432] sm:$0x1] %v431
        %v434 = vpack.c.bf16 %v378, %v378
        %s435 = scalar_lea.vmem %s230, 2 [#allocation9]
        %436 = vst [vmem:[%s435] sm:$0x1] %v434
        %v437 = vpack.c.bf16 %v388, %v388
        %s438 = scalar_lea.vmem %s230, 3 [#allocation9]
        %439 = vst [vmem:[%s438] sm:$0x1] %v437
        %v440 = vpack.c.bf16 %v398, %v398
        %s441 = scalar_lea.vmem %s230, 4 [#allocation9]
        %442 = vst [vmem:[%s441] sm:$0x1] %v440
        %v443 = vpack.c.bf16 %v408, %v408
        %s444 = scalar_lea.vmem %s230, 5 [#allocation9]
        %445 = vst [vmem:[%s444] sm:$0x1] %v443
        %v446 = vpack.c.bf16 %v418, %v418
        %s447 = scalar_lea.vmem %s230, 6 [#allocation9]
        %448 = vst [vmem:[%s447] sm:$0x1] %v446
        %v449 = vpack.c.bf16 %v428, %v428
        %s450 = scalar_lea.vmem %s230, 7 [#allocation9]
        %451 = vst [vmem:[%s450] sm:$0x1] %v449
        %s452 = sand.u32 %s114, 1
        %s453 = scalar_lea.sflag [#allocation4], %s452
        %s454 = sand.u32 %s114, 1
        %s455 = smul.addr %s454, 8
        %s456 = scalar_lea.vmem [#allocation9], %s455
        // Predicated region
        $region45: #{tpu_custom_call.1} parent=31 // pred_check
          %p457 = pneg %p124
        $region46: #{tpu_custom_call.1} parent=31 // pred_check_branch
          %459 = sbr.rel (%p457) target = $region48
        $region47: #{tpu_custom_call.1} parent=31 // pred_region
          %s461 = ssub.s32 128, 128
          %462 = vsyncadd %s453, %s461
          %s463 = smul.addr %s26, 8
          %s464 = sadd.s32 %s27, %s463
          %s465 = smul.addr %s464, 16
          %s466 = scalar_lea.hbm %s3, %s465
          %s467 = sshll.u32 %s456, 4
          %s468 = int_to_ptr.vmem [resolvable:$true] %s467
          %473 = dma.vmem_to_hbm [thread:$0]  %s468, 128, %s466, %s453, 16, 16, 1
        $region48: #{tpu_custom_call.1} parent=31 // pred_fallthru
          _
      $region32: #{tpu_custom_call.1} parent=5 // pred_fallthru
        _
      %p474 = scmp.le.s32.totalorder 2, %s17
      // Predicated region
      $region49: #{tpu_custom_call.1} parent=5 // pred_check
        %p475 = pneg %p474
      $region50: #{tpu_custom_call.1} parent=5 // pred_check_branch
        %477 = sbr.rel (%p475) target = $region52
      $region51: #{tpu_custom_call.1} parent=5 // pred_region
        %s478 = ssub.s32 %s17, 2
        // Predicated region
        $region53: #{tpu_custom_call.1} parent=51 // pred_check
          %p479 = pneg %p130
        $region54: #{tpu_custom_call.1} parent=51 // pred_check_branch
          %481 = sbr.rel (%p479) target = $region56
        $region55: #{tpu_custom_call.1} parent=51 // pred_region
          %s482 = sand.u32 %s115, 1
          %s483 = scalar_lea.sflag [#allocation4], %s482
          %s484 = sand.u32 %s115, 1
          %s485 = smul.addr %s484, 8
          %s486 = scalar_lea.vmem [#allocation9], %s485
          %487 = dma.done %s483, 128
        $region56: #{tpu_custom_call.1} parent=51 // pred_fallthru
          _
      $region52: #{tpu_custom_call.1} parent=5 // pred_fallthru
        _
    $region6: #{tpu_custom_call.1} parent=1 // loop_footer
      %s21 = sadd.s32 1, %s17
    $region7: #{tpu_custom_call.1} parent=1 // loop_footer_branch
      %16 = sbr.rel target = $region3
    $region8: #{tpu_custom_call.1} parent=1 // loop_exit
      _
    %488 = vsyncpa [#allocation3], 1
    %s489 = scalar_lea.sflag [#allocation3], 1
    %490 = vsyncpa %s489, 1
    %491 = vsyncpa [#allocation4], 1
    %s492 = scalar_lea.sflag [#allocation4], 1
    %493 = vsyncpa %s492, 1
    %494 = vsyncpa [#allocation5], 1
    %s495 = scalar_lea.sflag [#allocation5], 1
    %496 = vsyncpa %s495, 1
    %497 = vsyncpa [#allocation6], 1
    %s498 = scalar_lea.sflag [#allocation6], 1
    %499 = vsyncpa %s498, 1

</llo_original>
